<compile_context>
chip_gen: v7x
topology: tpu7x:2x2x1
jax: 0.10.0
libtpu: 0.0.40
codegen_flags: <defaults>
</compile_context>

<pallas_src>
import functools

import jax
import jax.numpy as jnp
from jax.experimental import pallas as pl
from jax.experimental.pallas import tpu as pltpu


def _span_ner_kernel(hid_ref, spans_ref, wslab_ref, out_ref, *, H, W1PAD):
    """One span-chunk: gather start/end rows, width+bias lookup, merged classifier.

    hid_ref   : (B*S, H)            bf16  encoder output, batch-flattened
    spans_ref : (NSC, 3)            int32 [start_global, end_global, width]
    wslab_ref : (2H + W1PAD + 16, LPAD) bf16
                rows [0:H)          = start-chunk of merged classifier weight
                rows [H:2H)         = end-chunk
                rows [2H:2H+W1PAD)  = width_embedding @ width-chunk (pre-folded)
                row  2H+W1PAD       = merged bias
    out_ref   : (NSC, LPAD)         f32   [ner_logits | attr_logits | pad]
    """
    hid = hid_ref[...]                                   # (BS, H) bf16
    spans = spans_ref[...]                               # (NSC, 3) int32
    start = spans[:, 0:1]                                # (NSC, 1)
    end = spans[:, 1:2]
    width = spans[:, 2:3]
    BS = hid.shape[0]
    NSC = spans.shape[0]

    # --- stacked start/end one-hot gather: one MXU matmul for both ---
    # (out-of-range indices silently yield a zero row, as in the old version)
    idx = jnp.concatenate([start, end], axis=0)          # (2*NSC, 1)
    iota_tok = jax.lax.broadcasted_iota(jnp.int32, (2 * NSC, BS), 1)
    oh_se = (iota_tok == idx).astype(jnp.bfloat16)       # (2*NSC, BS)
    se_ee = jnp.dot(oh_se, hid, preferred_element_type=jnp.float32)   # (2*NSC, H)
    se = se_ee[:NSC].astype(jnp.bfloat16)                # (NSC, H)
    ee = se_ee[NSC:].astype(jnp.bfloat16)                # (NSC, H)

    # --- width-embedding-through-classifier + merged bias: one matmul ---
    # column `width` picks the pre-folded width row; column W1PAD always picks
    # the bias row (width > max_span_length silently contributes zero, same
    # caveat as nn.Embedding out-of-range would be an error in PyTorch).
    iota_wb = jax.lax.broadcasted_iota(jnp.int32, (NSC, W1PAD + 16), 1)
    oh_wb = jnp.logical_or(iota_wb == width, iota_wb == W1PAD).astype(jnp.bfloat16)
    wb = jnp.dot(oh_wb, wslab_ref[2 * H:, :],
                 preferred_element_type=jnp.float32)     # (NSC, LPAD)

    # --- merged NER|ATTR classifier on the start/end feature chunks ---
    logits = (jnp.dot(se, wslab_ref[0:H, :], preferred_element_type=jnp.float32)
              + jnp.dot(ee, wslab_ref[H:2 * H, :], preferred_element_type=jnp.float32)
              + wb)
    out_ref[...] = logits                                # lane-dense (NSC, 128) store


def ner_model_forward(input_dict, params, *, span_chunks=2):
    """Pallas implementation of NERModel.forward (inference mode: dropout = id)."""
    # ---- encoder stand-in (glue, plain JAX) ----
    ids = input_dict['input_ids']                          # (B, S) int32
    mask = input_dict['input_masks'].astype(jnp.float32)   # (B, S)
    tok = jnp.take(params['enc_tok_emb'], ids, axis=0)     # (B, S, H)
    hid = jnp.tanh(tok @ params['enc_w'] + params['enc_b']) * mask[..., None]

    B, S, H = hid.shape
    assert H % 16 == 0, "hidden size must be a multiple of 16 (bf16 sublane tile)"
    hid_flat = hid.reshape(B * S, H).astype(jnp.bfloat16)  # bf16: halves DMA bytes

    # ---- span indices, batch-flattened (start/end offset by b*S) ----
    spans = input_dict['spans_info'].astype(jnp.int32)     # (B, NS, 3)
    NS = spans.shape[1]
    boff = (jnp.arange(B, dtype=jnp.int32) * S)[:, None]   # (B, 1)
    spans_flat = jnp.stack(
        [spans[:, :, 0] + boff, spans[:, :, 1] + boff, spans[:, :, 2]],
        axis=-1).reshape(B * NS, 3)                        # (B*NS, 3)

    # ---- merged, lane-padded classifier weight slab (static; cheap host prep) ----
    wtab = params['width_embedding'].astype(jnp.float32)   # (W1, Wd)
    W1 = wtab.shape[0]
    w_ner, b_ner = params['ner_w'], params['ner_b']        # (2H+Wd, Lner), (Lner,)
    w_attr, b_attr = params['attr_w'], params['attr_b']    # (2H+Wd, Lattr), (Lattr,)
    Lner, Lattr = w_ner.shape[1], w_attr.shape[1]
    L = Lner + Lattr
    LPAD = ((L + 127) // 128) * 128                        # lane-dense output width
    W1PAD = ((W1 + 15) // 16) * 16                         # 16-row aligned chunks

    w_all = jnp.pad(jnp.concatenate([w_ner, w_attr], axis=1), ((0, 0), (0, LPAD - L)))
    b_all = jnp.pad(jnp.concatenate([b_ner, b_attr], axis=0), (0, LPAD - L))
    w_start_c = w_all[:H]                                  # (H, LPAD)
    w_end_c = w_all[H:2 * H]                               # (H, LPAD)
    width_logits = wtab @ w_all[2 * H:]                    # (W1, LPAD)  pre-folded

    wb_table = jnp.zeros((W1PAD + 16, LPAD), jnp.float32)
    wb_table = wb_table.at[:W1, :].set(width_logits)
    wb_table = wb_table.at[W1PAD, :].set(b_all)            # merged bias row
    wslab = jnp.concatenate([w_start_c, w_end_c, wb_table],
                            axis=0).astype(jnp.bfloat16)   # (2H+W1PAD+16, LPAD)

    # ---- grid: split flattened spans into `span_chunks` parallel chunks ----
    total_spans = B * NS
    assert total_spans % span_chunks == 0
    NSC = total_spans // span_chunks
    assert NSC % 8 == 0, "span chunk size must be a multiple of 8"
    BS = B * S

    kern = functools.partial(_span_ner_kernel, H=H, W1PAD=W1PAD)
    logits_pad = pl.pallas_call(
        kern,
        out_shape=jax.ShapeDtypeStruct((total_spans, LPAD), jnp.float32),
        grid=(span_chunks,),
        in_specs=[
            pl.BlockSpec((BS, H), lambda i: (0, 0)),        # hid (resident)
            pl.BlockSpec((NSC, 3), lambda i: (i, 0)),       # span-index chunk
            pl.BlockSpec(wslab.shape, lambda i: (0, 0)),    # weight slab (resident)
        ],
        out_specs=pl.BlockSpec((NSC, LPAD), lambda i: (i, 0)),
        compiler_params=pltpu.CompilerParams(
            dimension_semantics=("parallel",)),
    )(hid_flat, spans_flat, wslab)

    logits = logits_pad.reshape(B, NS, LPAD)
    return {'ner_logits': logits[..., :Lner],
            'ner_masks': input_dict['spans_masks'],
            'attr_logits': logits[..., Lner:Lner + Lattr]}


def _reference_forward(input_dict, params):
    """Pure-JAX f32 reference mirroring the PyTorch forward."""
    ids = input_dict['input_ids']
    mask = input_dict['input_masks'].astype(jnp.float32)
    tok = jnp.take(params['enc_tok_emb'], ids, axis=0)
    hid = jnp.tanh(tok @ params['enc_w'] + params['enc_b']) * mask[..., None]

    spans = input_dict['spans_info']
    start, end, width = spans[:, :, 0], spans[:, :, 1], spans[:, :, 2]
    se = jnp.take_along_axis(hid, start[..., None], axis=1)
    ee = jnp.take_along_axis(hid, end[..., None], axis=1)
    we = jnp.take(params['width_embedding'], width, axis=0)
    emb = jnp.concatenate([se, ee, we], axis=-1)
    ner = emb @ params['ner_w'] + params['ner_b']
    attr = emb @ params['attr_w'] + params['attr_b']
    return ner, attr


if __name__ == "__main__":
    # small shapes consistent with the module
    B, S, H = 2, 16, 32           # batch, seq len, encoder hidden size
    NS = 8                        # candidate spans per example
    VOCAB = 50
    MAX_SPAN_LEN = 4
    WIDTH_DIM = 150               # matches the hard-coded "+ 150" in the classifier
    NUM_NER, NUM_ATTR = 7, 5

    key = jax.random.PRNGKey(0)
    ks = jax.random.split(key, 12)

    params = {
        'enc_tok_emb': jax.random.normal(ks[0], (VOCAB, H), jnp.float32) * 0.1,
        'enc_w': jax.random.normal(ks[1], (H, H), jnp.float32) * 0.1,
        'enc_b': jax.random.normal(ks[2], (H,), jnp.float32) * 0.1,
        'width_embedding': jax.random.normal(ks[3], (MAX_SPAN_LEN + 1, WIDTH_DIM),
                                             jnp.float32) * 0.1,
        'ner_w': jax.random.normal(ks[4], (2 * H + WIDTH_DIM, NUM_NER),
                                   jnp.float32) * 0.1,
        'ner_b': jax.random.normal(ks[5], (NUM_NER,), jnp.float32) * 0.1,
        'attr_w': jax.random.normal(ks[6], (2 * H + WIDTH_DIM, NUM_ATTR),
                                    jnp.float32) * 0.1,
        'attr_b': jax.random.normal(ks[7], (NUM_ATTR,), jnp.float32) * 0.1,
        # tok_classifier exists in __init__ but is unused in forward; omitted.
    }

    input_ids = jax.random.randint(ks[8], (B, S), 0, VOCAB, jnp.int32)
    input_masks = jnp.ones((B, S), jnp.int32)
    span_start = jax.random.randint(ks[9], (B, NS), 0, S - MAX_SPAN_LEN, jnp.int32)
    span_len = jax.random.randint(ks[10], (B, NS), 0, MAX_SPAN_LEN + 1, jnp.int32)
    span_end = span_start + span_len
    spans_info = jnp.stack([span_start, span_end, span_len], axis=-1)   # (B, NS, 3)
    spans_masks = (jax.random.uniform(ks[11], (B, NS)) > 0.2).astype(jnp.int32)

    input_dict = {
        'input_ids': input_ids,
        'input_masks': input_masks,
        'spans_info': spans_info,
        'spans_masks': spans_masks,
    }

    out = ner_model_forward(input_dict, params)
    jax.block_until_ready(out)

    ref_ner, ref_attr = _reference_forward(input_dict, params)
    assert out['ner_logits'].shape == (B, NS, NUM_NER)
    assert out['attr_logits'].shape == (B, NS, NUM_ATTR)
    # bf16 matmul operands (f32 accumulation) -> loosened tolerance vs f32 reference
    assert jnp.allclose(out['ner_logits'], ref_ner, atol=2e-2, rtol=2e-2)
    assert jnp.allclose(out['attr_logits'], ref_attr, atol=2e-2, rtol=2e-2)
    assert jnp.array_equal(out['ner_masks'], spans_masks)

    print("KERNEL_OK")
</pallas_src>

<mosaic_0001>
module attributes {stable_mosaic.version = 11 : i64} {
  func.func @_span_ner_kernel(%arg0: i32, %arg1: memref<32x32xbf16, #tpu.memory_space<vmem>>, %arg2: memref<8x3xi32, #tpu.memory_space<vmem>>, %arg3: memref<96x128xbf16, #tpu.memory_space<vmem>>, %arg4: memref<8x128xf32, #tpu.memory_space<vmem>>) attributes {dimension_semantics = [#tpu.dimension_semantics<parallel>], iteration_bounds = array<i64: 2>, scalar_prefetch = 0 : i64, scratch_operands = 0 : i64, tpu.core_type = #tpu.core_type<tc>, window_params = [{pipeline_mode = #tpu.pipeline_mode<synchronous>, transform_indices = @transform_0, window_bounds = array<i64: 32, 32>}, {transform_indices = @transform_1, window_bounds = array<i64: 8, 3>}, {pipeline_mode = #tpu.pipeline_mode<synchronous>, transform_indices = @transform_2, window_bounds = array<i64: 96, 128>}, {transform_indices = @transform_3, window_bounds = array<i64: 8, 128>}]} {
    %c0 = arith.constant 0 : index
    %c0_0 = arith.constant 0 : index
    %0 = vector.load %arg1[%c0, %c0_0] : memref<32x32xbf16, #tpu.memory_space<vmem>>, vector<32x32xbf16>
    %c0_1 = arith.constant 0 : index
    %c0_2 = arith.constant 0 : index
    %1 = vector.load %arg2[%c0_1, %c0_2] : memref<8x3xi32, #tpu.memory_space<vmem>>, vector<8x3xi32>
    %2 = vector.extract_strided_slice %1 {offsets = [0, 0], sizes = [8, 1], strides = [1, 1]} : vector<8x3xi32> to vector<8x1xi32>
    %3 = vector.extract_strided_slice %1 {offsets = [0, 1], sizes = [8, 1], strides = [1, 1]} : vector<8x3xi32> to vector<8x1xi32>
    %4 = vector.extract_strided_slice %1 {offsets = [0, 2], sizes = [8, 1], strides = [1, 1]} : vector<8x3xi32> to vector<8x1xi32>
    %5 = tpu.concatenate %2, %3 in 0 : vector<8x1xi32>, vector<8x1xi32> -> vector<16x1xi32>
    %6 = tpu.iota {dimensions = array<i32: 1>} : vector<16x32xi32>
    %7 = vector.broadcast %5 : vector<16x1xi32> to vector<16x32xi32>
    %8 = arith.cmpi eq, %6, %7 : vector<16x32xi32>
    %9 = arith.extui %8 : vector<16x32xi1> to vector<16x32xi32>
    %10 = arith.sitofp %9 : vector<16x32xi32> to vector<16x32xf32>
    %11 = arith.truncf %10 : vector<16x32xf32> to vector<16x32xbf16>
    %cst = arith.constant dense<0.000000e+00> : vector<16x32xf32>
    %12 = tpu.matmul %11, %0, %cst {dimension_numbers = #tpu.dot_dimension_numbers<[1], [0], [0], [1], [0, 0, 1, 1], [], []>} : vector<16x32xbf16>, vector<32x32xbf16>, vector<16x32xf32> -> vector<16x32xf32>
    %13 = vector.extract_strided_slice %12 {offsets = [0, 0], sizes = [8, 32], strides = [1, 1]} : vector<16x32xf32> to vector<8x32xf32>
    %14 = arith.truncf %13 : vector<8x32xf32> to vector<8x32xbf16>
    %15 = vector.extract_strided_slice %12 {offsets = [8, 0], sizes = [8, 32], strides = [1, 1]} : vector<16x32xf32> to vector<8x32xf32>
    %16 = arith.truncf %15 : vector<8x32xf32> to vector<8x32xbf16>
    %17 = tpu.iota {dimensions = array<i32: 1>} : vector<8x32xi32>
    %18 = vector.broadcast %4 : vector<8x1xi32> to vector<8x32xi32>
    %19 = arith.cmpi eq, %17, %18 : vector<8x32xi32>
    %c16_i32 = arith.constant 16 : i32
    %20 = vector.broadcast %c16_i32 : i32 to vector<8x32xi32>
    %21 = arith.cmpi eq, %17, %20 : vector<8x32xi32>
    %22 = arith.ori %19, %21 : vector<8x32xi1>
    %23 = arith.extui %22 : vector<8x32xi1> to vector<8x32xi32>
    %24 = arith.sitofp %23 : vector<8x32xi32> to vector<8x32xf32>
    %25 = arith.truncf %24 : vector<8x32xf32> to vector<8x32xbf16>
    %c64 = arith.constant 64 : index
    %c0_3 = arith.constant 0 : index
    %26 = vector.load %arg3[%c64, %c0_3] : memref<96x128xbf16, #tpu.memory_space<vmem>>, vector<32x128xbf16>
    %cst_4 = arith.constant dense<0.000000e+00> : vector<8x128xf32>
    %27 = tpu.matmul %25, %26, %cst_4 {dimension_numbers = #tpu.dot_dimension_numbers<[1], [0], [0], [1], [0, 0, 1, 1], [], []>} : vector<8x32xbf16>, vector<32x128xbf16>, vector<8x128xf32> -> vector<8x128xf32>
    %c0_5 = arith.constant 0 : index
    %c0_6 = arith.constant 0 : index
    %28 = vector.load %arg3[%c0_5, %c0_6] : memref<96x128xbf16, #tpu.memory_space<vmem>>, vector<32x128xbf16>
    %cst_7 = arith.constant dense<0.000000e+00> : vector<8x128xf32>
    %29 = tpu.matmul %14, %28, %cst_7 {dimension_numbers = #tpu.dot_dimension_numbers<[1], [0], [0], [1], [0, 0, 1, 1], [], []>} : vector<8x32xbf16>, vector<32x128xbf16>, vector<8x128xf32> -> vector<8x128xf32>
    %c32 = arith.constant 32 : index
    %c0_8 = arith.constant 0 : index
    %30 = vector.load %arg3[%c32, %c0_8] : memref<96x128xbf16, #tpu.memory_space<vmem>>, vector<32x128xbf16>
    %cst_9 = arith.constant dense<0.000000e+00> : vector<8x128xf32>
    %31 = tpu.matmul %16, %30, %cst_9 {dimension_numbers = #tpu.dot_dimension_numbers<[1], [0], [0], [1], [0, 0, 1, 1], [], []>} : vector<8x32xbf16>, vector<32x128xbf16>, vector<8x128xf32> -> vector<8x128xf32>
    %32 = arith.addf %29, %31 : vector<8x128xf32>
    %33 = arith.addf %32, %27 : vector<8x128xf32>
    %c0_10 = arith.constant 0 : index
    %c0_11 = arith.constant 0 : index
    %34 = vector.load %arg4[%c0_10, %c0_11] : memref<8x128xf32, #tpu.memory_space<vmem>>, vector<8x128xf32>
    tpu.vector_store %arg4[%c0_10, %c0_11], %33 {strides = array<i32>} : memref<8x128xf32, #tpu.memory_space<vmem>>, vector<8x128xf32>,
    return
  }
  func.func @transform_0(%arg0: i32) -> (i32, i32) {
    %c0_i32 = arith.constant 0 : i32
    %c0_i32_0 = arith.constant 0 : i32
    %c0_i32_1 = arith.constant 0 : i32
    return %c0_i32, %c0_i32_0 : i32, i32
  }
  func.func @transform_1(%arg0: i32) -> (i32, i32) {
    %c0_i32 = arith.constant 0 : i32
    %c0_i32_0 = arith.constant 0 : i32
    return %arg0, %c0_i32 : i32, i32
  }
  func.func @transform_2(%arg0: i32) -> (i32, i32) {
    %c0_i32 = arith.constant 0 : i32
    %c0_i32_0 = arith.constant 0 : i32
    %c0_i32_1 = arith.constant 0 : i32
    return %c0_i32, %c0_i32_0 : i32, i32
  }
  func.func @transform_3(%arg0: i32) -> (i32, i32) {
    %c0_i32 = arith.constant 0 : i32
    %c0_i32_0 = arith.constant 0 : i32
    return %arg0, %c0_i32 : i32, i32
  }
}

</mosaic_0001>

<llo_original>
// kernel: tpu_custom_call.1
$region0: #{tpu_custom_call.1}
  #allocation0 [shape = 'u32[]', space=smem, size = 0x4, offset = 0x4, fixed_abs, tag = 'smem constant byte address 0x4 - core index']
  #allocation1 [shape = 'u32[144,128]{1,0:T(1,128)}', space=vmem, size = 0x12000, scoped, tag = 'internal scratch']
  %s0 = inlined_call_operand.vmem [shape: bf16[32,32], index: 0, kind: input, shape index: {}]
  %s1 = inlined_call_operand.vmem [shape: s32[16,3], index: 1, kind: input, shape index: {}]
  %s2 = inlined_call_operand.hbm [shape: bf16[96,128], index: 2, kind: input, shape index: {}]
  %s3 = inlined_call_operand.hbm [shape: f32[16,128], index: 3, kind: output, shape index: {}]
  %s4 = sld [smem:[#allocation0]]
  $region49: #{tpu_custom_call.1} parent=0
    _
  %s6 = ssub.s32 1, %s4
  %s7 = scalar_select 0, %s6, %s4
  $region1: #{tpu_custom_call.1} parent=0
    #allocation2 [shape = 'u8[24576]{0}', space=vmem, size = 0x6000, scoped, tag = 'input window, operand 2, single buffered']
    #allocation3 [shape = 's32[2]{0}', space=sflag, size = 0x8, scoped, tag = 'scoped memory for tpu_custom_call.1']
    #allocation4 [shape = 's32[2]{0}', space=sflag, size = 0x8, scoped, tag = 'scoped memory for tpu_custom_call.1']
    #allocation5 [shape = 'u8[8192]{0}', space=vmem, size = 0x2000, scoped, tag = 'output window, operand 0']
    %8 = vsyncpa [#allocation3], 0
    %9 = vsyncpa [#allocation4], 0
    %s10 = scalar_lea.sflag [#allocation4], 1
    %11 = vsyncpa %s10, 0
    loop: start=0, step=1, limit=4
    $region2: #{tpu_custom_call.1} parent=1 // loop_pre_header
      _
    $region3: #{tpu_custom_call.1} parent=1 // loop_header
      %s13 = sphi 0, %s17
      %p14 = scmp.ge.s32.totalorder %s13, 4
      %s21 = sphi 0, %s21
      %s23 = sphi 0, %s21
      %s24 = sphi 0, %s23
      %s38 = sphi 0, %s24
      %s44 = sphi 0, %s46
      %s47 = sphi 0, %s44
      %s48 = sphi 0, %s47
      %s64 = sphi 0, %s48
      %s68 = sphi 0, %s68
      %s70 = sphi 0, %s68
      %s71 = sphi 0, %s70
      %s85 = sphi 0, %s71
      %s91 = sphi 0, %s93
      %s94 = sphi 0, %s91
      %s95 = sphi 0, %s94
      %s111 = sphi 0, %s95
    $region4: #{tpu_custom_call.1} parent=1 // loop_header_branch
      %16 = sbr.rel (%p14) target = $region8
    $region5: #{tpu_custom_call.1} parent=1 // loop_body
      %s18 = ssub.s32 %s13, 1
      %s19 = ssub.s32 %s13, 2
      %s20 = sadd.s32 %s13, 1
      %s22 = sadd.s32 %s21, 1
      %p25 = scmp.eq.s32.totalorder %s13, 1
      %p26 = scmp.ne.s32.totalorder %s21, %s23
      %p27 = scmp.eq.s32.totalorder %s13, 0
      %p28 = por %p26, %p27
      %p29 = scmp.ne.s32.totalorder %s21, %s23
      %p30 = scmp.eq.s32.totalorder %s18, 1
      %p31 = por %p29, %p30
      %p32 = scmp.ne.s32.totalorder %s23, %s24
      %p33 = scmp.eq.s32.totalorder %s18, 0
      %p34 = por %p32, %p33
      %p35 = scmp.ne.s32.totalorder %s23, %s24
      %p36 = scmp.eq.s32.totalorder %s19, 1
      %p37 = por %p35, %p36
      %p39 = scmp.ne.s32.totalorder %s24, %s38
      %p40 = scmp.eq.s32.totalorder %s19, 0
      %p41 = por %p39, %p40
      %s42 = ssub.s32 %s13, %s20
      %p43 = scmp.eq.s32.totalorder %s42, 0
      %s45 = sadd.s32 %s44, 1
      %s46 = scalar_select %p43, %s44, %s45
      %p49 = pneg %p43
      %p50 = scmp.eq.s32.totalorder %s13, 1
      %p51 = por %p49, %p50
      %p52 = scmp.ne.s32.totalorder %s44, %s47
      %p53 = scmp.eq.s32.totalorder %s13, 0
      %p54 = por %p52, %p53
      %p55 = scmp.ne.s32.totalorder %s44, %s47
      %p56 = scmp.eq.s32.totalorder %s18, 1
      %p57 = por %p55, %p56
      %p58 = scmp.ne.s32.totalorder %s47, %s48
      %p59 = scmp.eq.s32.totalorder %s18, 0
      %p60 = por %p58, %p59
      %p61 = scmp.ne.s32.totalorder %s47, %s48
      %p62 = scmp.eq.s32.totalorder %s19, 1
      %p63 = por %p61, %p62
      %p65 = scmp.ne.s32.totalorder %s48, %s64
      %p66 = scmp.eq.s32.totalorder %s19, 0
      %p67 = por %p65, %p66
      %s69 = sadd.s32 %s68, 1
      %p72 = scmp.eq.s32.totalorder %s13, 1
      %p73 = scmp.ne.s32.totalorder %s68, %s70
      %p74 = scmp.eq.s32.totalorder %s13, 0
      %p75 = por %p73, %p74
      %p76 = scmp.ne.s32.totalorder %s68, %s70
      %p77 = scmp.eq.s32.totalorder %s18, 1
      %p78 = por %p76, %p77
      %p79 = scmp.ne.s32.totalorder %s70, %s71
      %p80 = scmp.eq.s32.totalorder %s18, 0
      %p81 = por %p79, %p80
      %p82 = scmp.ne.s32.totalorder %s70, %s71
      %p83 = scmp.eq.s32.totalorder %s19, 1
      %p84 = por %p82, %p83
      %p86 = scmp.ne.s32.totalorder %s71, %s85
      %p87 = scmp.eq.s32.totalorder %s19, 0
      %p88 = por %p86, %p87
      %s89 = ssub.s32 %s13, %s20
      %p90 = scmp.eq.s32.totalorder %s89, 0
      %s92 = sadd.s32 %s91, 1
      %s93 = scalar_select %p90, %s91, %s92
      %p96 = pneg %p90
      %p97 = scmp.eq.s32.totalorder %s13, 1
      %p98 = por %p96, %p97
      %p99 = scmp.ne.s32.totalorder %s91, %s94
      %p100 = scmp.eq.s32.totalorder %s13, 0
      %p101 = por %p99, %p100
      %p102 = scmp.ne.s32.totalorder %s91, %s94
      %p103 = scmp.eq.s32.totalorder %s18, 1
      %p104 = por %p102, %p103
      %p105 = scmp.ne.s32.totalorder %s94, %s95
      %p106 = scmp.eq.s32.totalorder %s18, 0
      %p107 = por %p105, %p106
      %p108 = scmp.ne.s32.totalorder %s94, %s95
      %p109 = scmp.eq.s32.totalorder %s19, 1
      %p110 = por %p108, %p109
      %p112 = scmp.ne.s32.totalorder %s95, %s111
      %p113 = scmp.eq.s32.totalorder %s19, 0
      %p114 = por %p112, %p113
      %p115 = scmp.le.s32.totalorder 1, %s13
      %p116 = scmp.lt.s32.totalorder %s13, 3
      %p117 = pnand %p115, %p116
      %p118 = pneg %p117
      // Predicated region
      $region9: #{tpu_custom_call.1} parent=5 // pred_check
        _
      $region10: #{tpu_custom_call.1} parent=5 // pred_check_branch
        %120 = sbr.rel (%p117) target = $region12
      $region11: #{tpu_custom_call.1} parent=5 // pred_region
        %s121 = ssub.s32 %s13, 1
        // Predicated region
        $region13: #{tpu_custom_call.1} parent=11 // pred_check
          %p122 = pneg %p34
        $region14: #{tpu_custom_call.1} parent=11 // pred_check_branch
          %124 = sbr.rel (%p122) target = $region16
        $region15: #{tpu_custom_call.1} parent=11 // pred_region
          _
        $region16: #{tpu_custom_call.1} parent=11 // pred_fallthru
          _
        // Predicated region
        $region17: #{tpu_custom_call.1} parent=11 // pred_check
          %p125 = pneg %p81
        $region18: #{tpu_custom_call.1} parent=11 // pred_check_branch
          %127 = sbr.rel (%p125) target = $region20
        $region19: #{tpu_custom_call.1} parent=11 // pred_region
          %s129 = ssub.s32 768, 768
          %130 = vsyncadd [#allocation3], %s129
          %s131 = sshll.u32 [#allocation2], 4
          %s132 = int_to_ptr.vmem [resolvable:$true] %s131
          %137 = dma.hbm_to_vmem [thread:$0]  %s2, 768, %s132, [#allocation3], 64, 64, 4
        $region20: #{tpu_custom_call.1} parent=11 // pred_fallthru
          _
      $region12: #{tpu_custom_call.1} parent=5 // pred_fallthru
        _
      %p138 = scmp.lt.s32.totalorder %s13, 2
      // Predicated region
      $region21: #{tpu_custom_call.1} parent=5 // pred_check
        %p139 = pneg %p138
      $region22: #{tpu_custom_call.1} parent=5 // pred_check_branch
        %141 = sbr.rel (%p139) target = $region24
      $region23: #{tpu_custom_call.1} parent=5 // pred_region
        // Predicated region
        $region25: #{tpu_custom_call.1} parent=23 // pred_check
          %p142 = pneg %p54
        $region26: #{tpu_custom_call.1} parent=23 // pred_check_branch
          %144 = sbr.rel (%p142) target = $region28
        $region27: #{tpu_custom_call.1} parent=23 // pred_region
          %p145 = scmp.lt.s32.totalorder %s13, 1
          %s146 = scalar_select %p145, %s13, 1
          %s147 = smul.addr %s146, 8
          %s148 = scalar_lea.vmem %s1, %s147
        $region28: #{tpu_custom_call.1} parent=23 // pred_fallthru
          _
      $region24: #{tpu_custom_call.1} parent=5 // pred_fallthru
        _
      %p149 = scmp.le.s32.totalorder 1, %s13
      %p150 = scmp.lt.s32.totalorder %s13, 3
      %p151 = pnand %p149, %p150
      %p152 = pneg %p151
      // Predicated region
      $region29: #{tpu_custom_call.1} parent=5 // pred_check
        _
      $region30: #{tpu_custom_call.1} parent=5 // pred_check_branch
        %154 = sbr.rel (%p151) target = $region32
      $region31: #{tpu_custom_call.1} parent=5 // pred_region
        %s155 = ssub.s32 %s13, 1
        // Predicated region
        $region33: #{tpu_custom_call.1} parent=31 // pred_check
          %p156 = pneg %p81
        $region34: #{tpu_custom_call.1} parent=31 // pred_check_branch
          %158 = sbr.rel (%p156) target = $region36
        $region35: #{tpu_custom_call.1} parent=31 // pred_region
          %159 = dma.done [#allocation3], 768
        $region36: #{tpu_custom_call.1} parent=31 // pred_fallthru
          _
        %p160 = pneg %p34
        %p161 = pneg %p31
        %p162 = scmp.lt.s32.totalorder %s18, 1
        %s163 = scalar_select %p162, %s18, 1
        %s164 = smul.addr %s163, 8
        %s165 = scalar_lea.vmem %s1, %s164
        %p166 = pneg %p60
        %p167 = pneg %p57
        %p168 = pneg %p81
        %p169 = pneg %p78
        %p170 = pneg %p107
        %p171 = pneg %p104
        %s172 = sand.u32 %s94, 1
        %s173 = scalar_lea.sflag [#allocation4], %s172
        %s174 = sand.u32 %s94, 1
        %s175 = smul.addr %s174, 8
        %s176 = scalar_lea.vmem [#allocation5], %s175
        %p177 = scmp.lt.s32.totalorder %s18, 1
        %s178 = scalar_select %p177, %s18, 1
        %s179 = smul.addr %s178, 8
        %s180 = scalar_lea.vmem %s1, %s179
        %v182 = vld [vmem:[%s0] sm:$0xf]
        %v183 = vld [vmem:[%s0 + $0x4] sm:$0xf]
        %v184 = vld [vmem:[%s0 + $0x8] sm:$0xf]
        %v185 = vld [vmem:[%s0 + $0xc] sm:$0xf]
        %v186 = vld [vmem:[%s180] sm:$0xff]
        %187 = vrot.lane.b32.xlu0 %v186, 127
        %v188 = vpop.permute.xlu0 %187
        %v189 = vlaneseq
        %v190 = vand.u32 %v189, 127
        %191 = vset.pattern.permute.xlu0 0
        %192 = vperm.xlu0 %191, %v186
        %v193 = vpop.permute.xlu0 %192
        %194 = vset.pattern.permute.xlu0 0
        %195 = vperm.xlu0 %194, %v188
        %v196 = vpop.permute.xlu0 %195
        %vm197 = vcmp.eq.s32.totalorder %v190, %v193
        %vm198 = vcmp.eq.s32.totalorder %v190, %v196
        %v199 = vsel %vm197, 1, 0
        %v200 = vsel %vm198, 1, 0
        %v201 = vcvt.s32.f32 %v199
        %v202 = vcvt.s32.f32 %v200
        %v203 = vpack.c.bf16 %v202, %v201
        %v208 = vunpack.c.l.b16 %v182
        %v209 = vunpack.c.l.b16 %v183
        %v210 = vunpack.c.l.b16 %v184
        %v211 = vunpack.c.l.b16 %v185
        %v212 = vpack.c.b16 %v209, %v208
        %v213 = vpack.c.b16 %v211, %v210
        %vm216 = vcmask 261120
        %v218 = vsel %vm216, %v203, 0
        %220 = vmatprep.subr.bf16.mxu0 0
        %221 = vmatpush1.bf16.msra.mxu0 %v212
        %222 = vmatprep.subr.bf16.mxu0 0
        %223 = vmatpush1.bf16.msra.mxu0 %v213
        %224 = vmatprep.subr.bf16.mxu0 0
        %225 = vmatpush1.bf16.msra.mxu0 0
        %226 = vmatprep.subr.bf16.mxu0 0
        %227 = vmatpush1.bf16.msra.mxu0 0
        %228 = vmatprep.subr.bf16.mxu0 0
        %229 = vmatpush1.bf16.msra.mxu0 0
        %230 = vmatprep.subr.bf16.mxu0 0
        %231 = vmatpush1.bf16.msra.mxu0 0
        %232 = vmatprep.subr.bf16.mxu0 0
        %233 = vmatpush1.bf16.msra.mxu0 0
        %234 = vmatprep.subr.bf16.mxu0 0
        %235 = vmatpush1.bf16.msra.mxu0 0
        %236 = vmatprep.subr.bf16.mxu0 0
        %237 = vmatpush1.bf16.msra.mxu0 0
        %238 = vmatprep.subr.bf16.mxu0 0
        %239 = vmatpush1.bf16.msra.mxu0 0
        %240 = vmatprep.subr.bf16.mxu0 0
        %241 = vmatpush1.bf16.msra.mxu0 0
        %242 = vmatprep.subr.bf16.mxu0 0
        %243 = vmatpush1.bf16.msra.mxu0 0
        %244 = vmatprep.subr.bf16.mxu0 0
        %245 = vmatpush1.bf16.msra.mxu0 0
        %246 = vmatprep.subr.bf16.mxu0 0
        %247 = vmatpush1.bf16.msra.mxu0 0
        %248 = vmatprep.subr.bf16.mxu0 0
        %249 = vmatpush1.bf16.msra.mxu0 0
        %250 = vmatprep.subr.bf16.mxu0 0
        %251 = vmatpush1.bf16.msra.mxu0 0
        %252 = vmatprep.mubr.bf16.mxu0 0
        %253 = vmatmul.mubr.bf16.gmra.mrb[0].mxu0 %v218
        %v254 = vpop.f32.mrb[0].mxu0
        %v255 = vadd.f32 0.0, %v254
        %v256 = vpop.f32.mrb[0].mxu0
        %v257 = vpop.f32.mrb[0].mxu0
        %v258 = vadd.f32 0.0, %v257
        %v259 = vpop.f32.mrb[0].mxu0
        %260 = vdwg.mxu0
        %v261 = vpack.c.bf16 %v255, %v255
        %v262 = vpack.c.bf16 %v258, %v258
        %263 = vset.pattern.permute.xlu0 2
        %264 = vperm.xlu0 %263, %v186
        %v265 = vpop.permute.xlu0 %264
        %vm266 = vcmp.eq.s32.totalorder %v190, %v265
        %vm267 = vcmp.eq.s32.totalorder %v190, 16
        %vm268 = vmor %vm266, %vm267
        %v269 = vsel %vm268, 1, 0
        %v270 = vcvt.s32.f32 %v269
        %v271 = vpack.c.bf16 %v270, %v270
        %v272 = vld [vmem:[#allocation2 + $0x20] sm:$0xf]
        %v273 = vld [vmem:[#allocation2 + $0x24] sm:$0xf]
        %v274 = vld [vmem:[#allocation2 + $0x28] sm:$0xf]
        %v275 = vld [vmem:[#allocation2 + $0x2c] sm:$0xf]
        %v280 = vunpack.c.l.b16 %v272
        %v281 = vunpack.c.l.b16 %v273
        %v282 = vunpack.c.l.b16 %v274
        %v283 = vunpack.c.l.b16 %v275
        %v284 = vpack.c.b16 %v281, %v280
        %v285 = vpack.c.b16 %v283, %v282
        %v289 = vsel %vm216, %v271, 0
        %291 = vmatprep.subr.bf16.mxu0 0
        %292 = vmatpush1.bf16.msra.mxu0 %v284
        %293 = vmatprep.subr.bf16.mxu0 0
        %294 = vmatpush1.bf16.msra.mxu0 %v285
        %295 = vmatprep.subr.bf16.mxu0 0
        %296 = vmatpush1.bf16.msra.mxu0 0
        %297 = vmatprep.subr.bf16.mxu0 0
        %298 = vmatpush1.bf16.msra.mxu0 0
        %299 = vmatprep.subr.bf16.mxu0 0
        %300 = vmatpush1.bf16.msra.mxu0 0
        %301 = vmatprep.subr.bf16.mxu0 0
        %302 = vmatpush1.bf16.msra.mxu0 0
        %303 = vmatprep.subr.bf16.mxu0 0
        %304 = vmatpush1.bf16.msra.mxu0 0
        %305 = vmatprep.subr.bf16.mxu0 0
        %306 = vmatpush1.bf16.msra.mxu0 0
        %307 = vmatprep.subr.bf16.mxu0 0
        %308 = vmatpush1.bf16.msra.mxu0 0
        %309 = vmatprep.subr.bf16.mxu0 0
        %310 = vmatpush1.bf16.msra.mxu0 0
        %311 = vmatprep.subr.bf16.mxu0 0
        %312 = vmatpush1.bf16.msra.mxu0 0
        %313 = vmatprep.subr.bf16.mxu0 0
        %314 = vmatpush1.bf16.msra.mxu0 0
        %315 = vmatprep.subr.bf16.mxu0 0
        %316 = vmatpush1.bf16.msra.mxu0 0
        %317 = vmatprep.subr.bf16.mxu0 0
        %318 = vmatpush1.bf16.msra.mxu0 0
        %319 = vmatprep.subr.bf16.mxu0 0
        %320 = vmatpush1.bf16.msra.mxu0 0
        %321 = vmatprep.subr.bf16.mxu0 0
        %322 = vmatpush1.bf16.msra.mxu0 0
        %323 = vmatprep.mubr.bf16.mxu0 0
        %324 = vmatmul.mubr.bf16.gmra.mrb[0].mxu0 %v289
        %v325 = vpop.f32.mrb[0].mxu0
        %v326 = vadd.f32 0.0, %v325
        %v327 = vpop.f32.mrb[0].mxu0
        %v328 = vpop.f32.mrb[0].mxu0
        %v329 = vpop.f32.mrb[0].mxu0
        %330 = vdwg.mxu0
        %v331 = vld [vmem:[#allocation2] sm:$0xf]
        %v332 = vld [vmem:[#allocation2 + $0x4] sm:$0xf]
        %v333 = vld [vmem:[#allocation2 + $0x8] sm:$0xf]
        %v334 = vld [vmem:[#allocation2 + $0xc] sm:$0xf]
        %v335 = vld [vmem:[#allocation2 + $0x10] sm:$0xf]
        %v336 = vld [vmem:[#allocation2 + $0x14] sm:$0xf]
        %v337 = vld [vmem:[#allocation2 + $0x18] sm:$0xf]
        %v338 = vld [vmem:[#allocation2 + $0x1c] sm:$0xf]
        %v343 = vunpack.c.l.b16 %v335
        %v344 = vunpack.c.l.b16 %v336
        %v345 = vunpack.c.l.b16 %v337
        %v346 = vunpack.c.l.b16 %v338
        %v347 = vpack.c.b16 %v344, %v343
        %v348 = vpack.c.b16 %v346, %v345
        %v352 = vsel %vm216, %v262, 0
        %354 = vmatprep.subr.bf16.mxu0 0
        %355 = vmatpush1.bf16.msra.mxu0 %v347
        %356 = vmatprep.subr.bf16.mxu0 0
        %357 = vmatpush1.bf16.msra.mxu0 %v348
        %358 = vmatprep.subr.bf16.mxu0 0
        %359 = vmatpush1.bf16.msra.mxu0 0
        %360 = vmatprep.subr.bf16.mxu0 0
        %361 = vmatpush1.bf16.msra.mxu0 0
        %362 = vmatprep.subr.bf16.mxu0 0
        %363 = vmatpush1.bf16.msra.mxu0 0
        %364 = vmatprep.subr.bf16.mxu0 0
        %365 = vmatpush1.bf16.msra.mxu0 0
        %366 = vmatprep.subr.bf16.mxu0 0
        %367 = vmatpush1.bf16.msra.mxu0 0
        %368 = vmatprep.subr.bf16.mxu0 0
        %369 = vmatpush1.bf16.msra.mxu0 0
        %370 = vmatprep.subr.bf16.mxu0 0
        %371 = vmatpush1.bf16.msra.mxu0 0
        %372 = vmatprep.subr.bf16.mxu0 0
        %373 = vmatpush1.bf16.msra.mxu0 0
        %374 = vmatprep.subr.bf16.mxu0 0
        %375 = vmatpush1.bf16.msra.mxu0 0
        %376 = vmatprep.subr.bf16.mxu0 0
        %377 = vmatpush1.bf16.msra.mxu0 0
        %378 = vmatprep.subr.bf16.mxu0 0
        %379 = vmatpush1.bf16.msra.mxu0 0
        %380 = vmatprep.subr.bf16.mxu0 0
        %381 = vmatpush1.bf16.msra.mxu0 0
        %382 = vmatprep.subr.bf16.mxu0 0
        %383 = vmatpush1.bf16.msra.mxu0 0
        %384 = vmatprep.subr.bf16.mxu0 0
        %385 = vmatpush1.bf16.msra.mxu0 0
        %386 = vmatprep.mubr.bf16.mxu0 0
        %387 = vmatmul.mubr.bf16.gmra.mrb[0].mxu0 %v352
        %v388 = vpop.f32.mrb[0].mxu0
        %v389 = vadd.f32 0.0, %v388
        %v390 = vpop.f32.mrb[0].mxu0
        %v391 = vpop.f32.mrb[0].mxu0
        %v392 = vpop.f32.mrb[0].mxu0
        %393 = vdwg.mxu0
        %v398 = vunpack.c.l.b16 %v331
        %v399 = vunpack.c.l.b16 %v332
        %v400 = vunpack.c.l.b16 %v333
        %v401 = vunpack.c.l.b16 %v334
        %v402 = vpack.c.b16 %v399, %v398
        %v403 = vpack.c.b16 %v401, %v400
        %v407 = vsel %vm216, %v261, 0
        %409 = vmatprep.subr.bf16.mxu0 0
        %410 = vmatpush1.bf16.msra.mxu0 %v402
        %411 = vmatprep.subr.bf16.mxu0 0
        %412 = vmatpush1.bf16.msra.mxu0 %v403
        %413 = vmatprep.subr.bf16.mxu0 0
        %414 = vmatpush1.bf16.msra.mxu0 0
        %415 = vmatprep.subr.bf16.mxu0 0
        %416 = vmatpush1.bf16.msra.mxu0 0
        %417 = vmatprep.subr.bf16.mxu0 0
        %418 = vmatpush1.bf16.msra.mxu0 0
        %419 = vmatprep.subr.bf16.mxu0 0
        %420 = vmatpush1.bf16.msra.mxu0 0
        %421 = vmatprep.subr.bf16.mxu0 0
        %422 = vmatpush1.bf16.msra.mxu0 0
        %423 = vmatprep.subr.bf16.mxu0 0
        %424 = vmatpush1.bf16.msra.mxu0 0
        %425 = vmatprep.subr.bf16.mxu0 0
        %426 = vmatpush1.bf16.msra.mxu0 0
        %427 = vmatprep.subr.bf16.mxu0 0
        %428 = vmatpush1.bf16.msra.mxu0 0
        %429 = vmatprep.subr.bf16.mxu0 0
        %430 = vmatpush1.bf16.msra.mxu0 0
        %431 = vmatprep.subr.bf16.mxu0 0
        %432 = vmatpush1.bf16.msra.mxu0 0
        %433 = vmatprep.subr.bf16.mxu0 0
        %434 = vmatpush1.bf16.msra.mxu0 0
        %435 = vmatprep.subr.bf16.mxu0 0
        %436 = vmatpush1.bf16.msra.mxu0 0
        %437 = vmatprep.subr.bf16.mxu0 0
        %438 = vmatpush1.bf16.msra.mxu0 0
        %439 = vmatprep.subr.bf16.mxu0 0
        %440 = vmatpush1.bf16.msra.mxu0 0
        %441 = vmatprep.mubr.bf16.mxu0 0
        %442 = vmatmul.mubr.bf16.gmra.mrb[0].mxu0 %v407
        %v443 = vpop.f32.mrb[0].mxu0
        %v444 = vadd.f32 %v389, %v443
        %v445 = vpop.f32.mrb[0].mxu0
        %v446 = vpop.f32.mrb[0].mxu0
        %v447 = vpop.f32.mrb[0].mxu0
        %448 = vdwg.mxu0
        %v449 = vadd.f32 %v444, %v326
        %450 = vst [vmem:[%s176] sm:$0xff] %v449
        %s451 = sand.u32 %s94, 1
        %s452 = scalar_lea.sflag [#allocation4], %s451
        %s453 = sand.u32 %s94, 1
        %s454 = smul.addr %s453, 8
        %s455 = scalar_lea.vmem [#allocation5], %s454
        // Predicated region
        $region37: #{tpu_custom_call.1} parent=31 // pred_check
          %p456 = pneg %p104
        $region38: #{tpu_custom_call.1} parent=31 // pred_check_branch
          %458 = sbr.rel (%p456) target = $region40
        $region39: #{tpu_custom_call.1} parent=31 // pred_region
          %s460 = ssub.s32 128, 128
          %461 = vsyncadd %s452, %s460
          %s462 = smul.addr %s18, 128
          %s463 = scalar_lea.hbm %s3, %s462
          %s465 = sshll.u32 %s455, 4
          %s466 = int_to_ptr.vmem [resolvable:$true] %s465
          %468 = dma.vmem_to_hbm [thread:$0]  %s466, 128, %s463, %s452
        $region40: #{tpu_custom_call.1} parent=31 // pred_fallthru
          _
      $region32: #{tpu_custom_call.1} parent=5 // pred_fallthru
        _
      %p469 = scmp.le.s32.totalorder 2, %s13
      // Predicated region
      $region41: #{tpu_custom_call.1} parent=5 // pred_check
        %p470 = pneg %p469
      $region42: #{tpu_custom_call.1} parent=5 // pred_check_branch
        %472 = sbr.rel (%p470) target = $region44
      $region43: #{tpu_custom_call.1} parent=5 // pred_region
        %s473 = ssub.s32 %s13, 2
        // Predicated region
        $region45: #{tpu_custom_call.1} parent=43 // pred_check
          %p474 = pneg %p110
        $region46: #{tpu_custom_call.1} parent=43 // pred_check_branch
          %476 = sbr.rel (%p474) target = $region48
        $region47: #{tpu_custom_call.1} parent=43 // pred_region
          %s477 = sand.u32 %s95, 1
          %s478 = scalar_lea.sflag [#allocation4], %s477
          %s479 = sand.u32 %s95, 1
          %s480 = smul.addr %s479, 8
          %s481 = scalar_lea.vmem [#allocation5], %s480
          %482 = dma.done %s478, 128
        $region48: #{tpu_custom_call.1} parent=43 // pred_fallthru
          _
      $region44: #{tpu_custom_call.1} parent=5 // pred_fallthru
        _
    $region6: #{tpu_custom_call.1} parent=1 // loop_footer
      %s17 = sadd.s32 1, %s13
    $region7: #{tpu_custom_call.1} parent=1 // loop_footer_branch
      %12 = sbr.rel target = $region3
    $region8: #{tpu_custom_call.1} parent=1 // loop_exit
      _
    %483 = vsyncpa [#allocation3], 1
    %s484 = scalar_lea.sflag [#allocation3], 1
    %485 = vsyncpa %s484, 1
    %486 = vsyncpa [#allocation4], 1
    %s487 = scalar_lea.sflag [#allocation4], 1
    %488 = vsyncpa %s487, 1

</llo_original>
